<compile_context>
chip_gen: v7x
topology: tpu7x:2x2x1
jax: 0.10.0
libtpu: 0.0.40
codegen_flags: <defaults>
</compile_context>

<pallas_src>
import functools
import math

import jax
import jax.numpy as jnp
from jax.experimental import pallas as pl
from jax.experimental.pallas import tpu as pltpu

_VMEM_LIMIT = 48 * 1024 * 1024   # cap; actual per-call usage is far below (v7x-safe)
_LINEAR_TM = 512                 # activation row tile (halves weight re-streaming vs 256)
_LINEAR_TN = 512                 # output-column tile (multiple of 128)
_LINEAR_TK = 512                 # contraction tile (keeps weight slab VMEM bounded)
_ATTN_BLOCK = 256                # q / kv tile cap (use 128 on v5e if tuning per-chip)


def _round_up(x, m):
    return (x + m - 1) // m * m


def _pick_tile(dim, cap, granule):
    """Largest tile <= cap that divides dim and is a multiple of `granule`;
    the whole dim if it already fits.  (Fixes the old `return dim` VMEM hazard.)"""
    if dim <= cap:
        return dim
    t = (cap // granule) * granule
    while t >= granule:
        if dim % t == 0:
            return t
        t -= granule
    return dim   # last resort for pathological dims (small models only)


# ---------------------------------------------------------------------------
# K-tiled fused linear:  y = x @ W + b   (bf16 MXU inputs, f32 accumulation)
# ---------------------------------------------------------------------------
def _linear_kernel(x_ref, w_ref, b_ref, o_ref, acc_ref):
    k = pl.program_id(2)

    @pl.when(k == 0)
    def _init():
        acc_ref[...] = jnp.zeros_like(acc_ref)

    acc_ref[...] += jnp.dot(x_ref[...], w_ref[...],
                            preferred_element_type=jnp.float32)

    @pl.when(k == pl.num_programs(2) - 1)
    def _finalize():
        o_ref[...] = (acc_ref[...] + b_ref[...]).astype(o_ref.dtype)


def _linear(x2d, w, b, *, out_dtype):
    M, K = x2d.shape
    _, N = w.shape
    tm = _pick_tile(M, _LINEAR_TM, 8)
    tn = _pick_tile(N, _LINEAR_TN, 128)
    tk = _pick_tile(K, _LINEAR_TK, 128)
    return pl.pallas_call(
        _linear_kernel,
        out_shape=jax.ShapeDtypeStruct((M, N), out_dtype),
        grid_spec=pltpu.PrefetchScalarGridSpec(
            num_scalar_prefetch=0,
            grid=(M // tm, N // tn, K // tk),
            in_specs=[
                pl.BlockSpec((tm, tk), lambda i, j, k: (i, k)),   # activations
                pl.BlockSpec((tk, tn), lambda i, j, k: (k, j)),   # weight slab
                pl.BlockSpec((1, tn), lambda i, j, k: (0, j)),    # bias slab
            ],
            out_specs=pl.BlockSpec((tm, tn), lambda i, j, k: (i, j)),
            scratch_shapes=[pltpu.VMEM((tm, tn), jnp.float32)],
        ),
        compiler_params=pltpu.CompilerParams(
            dimension_semantics=("parallel", "parallel", "arbitrary"),
            vmem_limit_bytes=_VMEM_LIMIT),
    )(x2d, w, b)


# ---------------------------------------------------------------------------
# Fused merge-heads + output projection:
#   out[b, t, :] = sum_h  y[b, h, t, :] @ Wo_heads[h]  + bo
# Reduces over the head axis as an "arbitrary" grid axis with an f32 accumulator,
# so no (B, H, T, D) -> (B, T, E) transpose / HBM round trip is needed and the
# final output slab is lane-dense.
# ---------------------------------------------------------------------------
def _merge_proj_kernel(y_ref, w_ref, b_ref, o_ref, acc_ref):
    h = pl.program_id(3)

    @pl.when(h == 0)
    def _init():
        acc_ref[...] = jnp.zeros_like(acc_ref)

    acc_ref[...] += jnp.dot(y_ref[...], w_ref[...],
                            preferred_element_type=jnp.float32)

    @pl.when(h == pl.num_programs(3) - 1)
    def _finalize():
        o_ref[...] = (acc_ref[...] + b_ref[...]).astype(o_ref.dtype)


def _merge_heads_output_proj(y, wo_heads, bo, *, out_dtype):
    B, H, T_pad, D = y.shape
    E = wo_heads.shape[-1]
    tm = _pick_tile(T_pad, 256, 8)
    tn = _pick_tile(E, _LINEAR_TN, 128)
    return pl.pallas_call(
        _merge_proj_kernel,
        out_shape=jax.ShapeDtypeStruct((B, T_pad, E), out_dtype),
        grid_spec=pltpu.PrefetchScalarGridSpec(
            num_scalar_prefetch=0,
            grid=(B, T_pad // tm, E // tn, H),
            in_specs=[
                pl.BlockSpec((None, None, tm, D), lambda b, i, j, h: (b, h, i, 0)),
                pl.BlockSpec((None, D, tn), lambda b, i, j, h: (h, 0, j)),
                pl.BlockSpec((1, tn), lambda b, i, j, h: (0, j)),
            ],
            out_specs=pl.BlockSpec((None, tm, tn), lambda b, i, j, h: (b, i, j)),
            scratch_shapes=[pltpu.VMEM((tm, tn), jnp.float32)],
        ),
        compiler_params=pltpu.CompilerParams(
            dimension_semantics=("parallel", "parallel", "parallel", "arbitrary"),
            vmem_limit_bytes=_VMEM_LIMIT),
    )(y, wo_heads, bo)


# ---------------------------------------------------------------------------
# Flash-attention core with online softmax (causal).
# ---------------------------------------------------------------------------
def _flash_attn_kernel(q_ref, k_ref, v_ref, o_ref, m_ref, l_ref, acc_ref, *, scale):
    qi = pl.program_id(2)
    ki = pl.program_id(3)

    @pl.when(ki == 0)
    def _init():
        m_ref[...] = jnp.full(m_ref.shape, -jnp.inf, dtype=jnp.float32)
        l_ref[...] = jnp.zeros(l_ref.shape, dtype=jnp.float32)
        acc_ref[...] = jnp.zeros(acc_ref.shape, dtype=jnp.float32)

    def _process_tile(apply_mask):
        # Fold 1/sqrt(D) into the small (block_q, D) q tile (not the score tile).
        q = (q_ref[...].astype(jnp.float32) * scale).astype(q_ref.dtype)
        k = k_ref[...]
        # q @ k^T without materialising the transpose: contract the D axis.
        s = jax.lax.dot_general(
            q, k, (((1,), (1,)), ((), ())),
            preferred_element_type=jnp.float32)            # (block_q, block_kv)
        if apply_mask:
            # Diagonal tile (qi == ki, block_q == block_kv): local indices suffice.
            # Padded KV columns only ever appear here and are masked the same way.
            r = jax.lax.broadcasted_iota(jnp.int32, s.shape, 0)
            c = jax.lax.broadcasted_iota(jnp.int32, s.shape, 1)
            s = jnp.where(c > r, -jnp.inf, s)
        m_prev = m_ref[...]
        m_new = jnp.maximum(m_prev, jnp.max(s, axis=-1, keepdims=True))
        alpha = jnp.exp(m_prev - m_new)
        p = jnp.exp(s - m_new)
        l_ref[...] = alpha * l_ref[...] + jnp.sum(p, axis=-1, keepdims=True)
        acc_ref[...] = alpha * acc_ref[...] + jnp.dot(
            p.astype(v_ref.dtype), v_ref[...], preferred_element_type=jnp.float32)
        m_ref[...] = m_new

    # Fully-visible interior tiles: no mask work at all.
    @pl.when(ki < qi)
    def _interior():
        _process_tile(apply_mask=False)

    # Diagonal tile: masked, and (being the last causally visible tile) finalize here.
    # Steps with ki > qi do nothing and (thanks to the clamped index_map) DMA nothing.
    @pl.when(ki == qi)
    def _diagonal():
        _process_tile(apply_mask=True)
        inv_l = pl.reciprocal(l_ref[...], approx=True)
        o_ref[...] = (acc_ref[...] * inv_l).astype(o_ref.dtype)


def _flash_attention(q, k, v, *, block_q, block_kv):
    assert block_q == block_kv, "kv index clamp assumes block_q == block_kv"
    B, H, T_pad, D = q.shape
    scale = 1.0 / math.sqrt(D)
    kernel = functools.partial(_flash_attn_kernel, scale=scale)
    q_spec = pl.BlockSpec((None, None, block_q, D),
                          lambda b, h, qi, ki: (b, h, qi, 0))
    # Clamp the kv block index: for ki > qi the block index repeats, so Pallas
    # elides the HBM->VMEM copy of causally-skipped K/V tiles entirely.
    kv_spec = pl.BlockSpec((None, None, block_kv, D),
                           lambda b, h, qi, ki: (b, h, jnp.minimum(ki, qi), 0))
    return pl.pallas_call(
        kernel,
        out_shape=jax.ShapeDtypeStruct((B, H, T_pad, D), q.dtype),
        grid_spec=pltpu.PrefetchScalarGridSpec(
            num_scalar_prefetch=0,
            grid=(B, H, T_pad // block_q, T_pad // block_kv),
            in_specs=[q_spec, kv_spec, kv_spec],
            out_specs=pl.BlockSpec((None, None, block_q, D),
                                   lambda b, h, qi, ki: (b, h, qi, 0)),
            scratch_shapes=[
                pltpu.VMEM((block_q, 1), jnp.float32),   # running row max m
                pltpu.VMEM((block_q, 1), jnp.float32),   # running denominator l
                pltpu.VMEM((block_q, D), jnp.float32),   # output accumulator
            ]),
        compiler_params=pltpu.CompilerParams(
            dimension_semantics=("parallel", "parallel", "parallel", "arbitrary"),
            vmem_limit_bytes=_VMEM_LIMIT),
    )(q, k, v)


# ---------------------------------------------------------------------------
# Parameter preparation (done ONCE, outside the forward path): fuse QKV weights
# and reshape the output projection weight per-head.
# ---------------------------------------------------------------------------
def prepare_params(raw, *, n_heads):
    E = raw["wq"].shape[0]
    D = E // n_heads
    return {
        "w_qkv": jnp.concatenate(
            [raw["wq"], raw["wk"], raw["wv"]], axis=1).astype(jnp.bfloat16),
        "b_qkv": jnp.concatenate(
            [raw["bq"], raw["bk"], raw["bv"]], axis=1).astype(jnp.float32),
        "wo_heads": raw["wo"].reshape(n_heads, D, E).astype(jnp.bfloat16),
        "bo": raw["bo"].astype(jnp.float32),
    }


# ---------------------------------------------------------------------------
# Full module forward (soft_prompt=None, eval mode).
# ---------------------------------------------------------------------------
def causal_self_attention(x, params, *, n_heads):
    """x: (B, T, E).  params: output of prepare_params()."""
    B, T, E = x.shape
    assert E % n_heads == 0
    D = E // n_heads
    out_dtype = x.dtype

    # Tile sizes: pad T to the attention block.  For long sequences pad at 128
    # granularity (not 256) when T isn't a 256 multiple, to limit padding waste.
    if T <= _ATTN_BLOCK:
        block = _round_up(T, 8)
    elif T % 256 == 0:
        block = 256
    else:
        block = 128
    T_pad = _round_up(T, block)
    if T_pad != T:
        x = jnp.pad(x, ((0, 0), (0, T_pad - T), (0, 0)))

    xb = x.astype(jnp.bfloat16).reshape(B * T_pad, E)

    # Fused QKV projection: one MXU pass with N = 3E (pre-fused weights).
    qkv = _linear(xb, params["w_qkv"], params["b_qkv"],
                  out_dtype=jnp.bfloat16)                      # (B*T_pad, 3E)

    # Head-major layout (B, H, T_pad, D): lane axis is head_dim-contiguous.
    qkv = qkv.reshape(B, T_pad, 3, n_heads, D).transpose(2, 0, 3, 1, 4)
    q, k, v = qkv[0], qkv[1], qkv[2]

    y = _flash_attention(q, k, v, block_q=block, block_kv=block)  # (B, H, T_pad, D)

    # Fused merge-heads + output projection (no output-side transpose).
    out = _merge_heads_output_proj(y, params["wo_heads"], params["bo"],
                                   out_dtype=out_dtype)           # (B, T_pad, E)
    return out[:, :T, :]


# ---------------------------------------------------------------------------
# Pure-JAX f32 reference mirroring the PyTorch forward (soft_prompt=None, eval).
# ---------------------------------------------------------------------------
def _reference(x, raw, n_heads):
    B, T, E = x.shape
    D = E // n_heads
    q = x @ raw["wq"] + raw["bq"]
    k = x @ raw["wk"] + raw["bk"]
    v = x @ raw["wv"] + raw["bv"]
    q = q.reshape(B, T, n_heads, D).transpose(0, 2, 1, 3)
    k = k.reshape(B, T, n_heads, D).transpose(0, 2, 1, 3)
    v = v.reshape(B, T, n_heads, D).transpose(0, 2, 1, 3)
    att = jnp.einsum("bhtd,bhsd->bhts", q, k) / math.sqrt(D)
    mask = jnp.triu(jnp.ones((T, T), dtype=bool), k=1)
    att = jnp.where(mask[None, None], -jnp.inf, att)
    att = jax.nn.softmax(att, axis=-1)
    y = jnp.einsum("bhts,bhsd->bhtd", att, v)
    y = y.transpose(0, 2, 1, 3).reshape(B, T, E)
    return y @ raw["wo"] + raw["bo"]


if __name__ == "__main__":
    B, T, E, H = 2, 8, 32, 4   # batch, block_size (seq), embedding dims, heads
    key = jax.random.PRNGKey(0)
    keys = jax.random.split(key, 9)

    bound = 1.0 / math.sqrt(E)  # PyTorch nn.Linear default init scale
    raw_params = {
        "wq": jax.random.uniform(keys[0], (E, E), jnp.float32, -bound, bound),
        "wk": jax.random.uniform(keys[1], (E, E), jnp.float32, -bound, bound),
        "wv": jax.random.uniform(keys[2], (E, E), jnp.float32, -bound, bound),
        "wo": jax.random.uniform(keys[3], (E, E), jnp.float32, -bound, bound),
        "bq": jax.random.uniform(keys[4], (1, E), jnp.float32, -bound, bound),
        "bk": jax.random.uniform(keys[5], (1, E), jnp.float32, -bound, bound),
        "bv": jax.random.uniform(keys[6], (1, E), jnp.float32, -bound, bound),
        "bo": jax.random.uniform(keys[7], (1, E), jnp.float32, -bound, bound),
    }
    x = jax.random.normal(keys[8], (B, T, E), jnp.float32)

    params = prepare_params(raw_params, n_heads=H)   # one-time weight fusion
    out = causal_self_attention(x, params, n_heads=H)
    out = jax.block_until_ready(out)

    ref = _reference(x, raw_params, H)
    assert out.shape == (B, T, E)
    # bf16 MXU path -> loosened tolerance vs f32 reference.
    err = jnp.max(jnp.abs(out - ref))
    assert jnp.allclose(out, ref, atol=5e-2, rtol=5e-2), f"mismatch vs reference, max err {err}"

    print("KERNEL_OK")
</pallas_src>

<mosaic_0001>
module attributes {stable_mosaic.version = 11 : i64} {
  func.func @_linear_kernel(%arg0: i32, %arg1: i32, %arg2: i32, %arg3: memref<16x32xbf16, #tpu.memory_space<vmem>>, %arg4: memref<32x96xbf16, #tpu.memory_space<vmem>>, %arg5: memref<1x96xf32, #tpu.memory_space<vmem>>, %arg6: memref<16x96xbf16, #tpu.memory_space<vmem>>, %arg7: memref<16x96xf32, #tpu.memory_space<vmem>>) attributes {dimension_semantics = [#tpu.dimension_semantics<parallel>, #tpu.dimension_semantics<parallel>, #tpu.dimension_semantics<arbitrary>], iteration_bounds = array<i64: 1, 1, 1>, scalar_prefetch = 0 : i64, scratch_operands = 1 : i64, tpu.core_type = #tpu.core_type<tc>, window_params = [{transform_indices = @transform_0, window_bounds = array<i64: 16, 32>}, {transform_indices = @transform_1, window_bounds = array<i64: 32, 96>}, {transform_indices = @transform_2, window_bounds = array<i64: 1, 96>}, {transform_indices = @transform_3, window_bounds = array<i64: 16, 96>}]} {
    %c0_i32 = arith.constant 0 : i32
    %0 = arith.cmpi eq, %arg2, %c0_i32 : i32
    %1 = arith.extui %0 : i1 to i32
    %c0_i32_0 = arith.constant 0 : i32
    %2 = arith.cmpi ne, %1, %c0_i32_0 : i32
    scf.if %2 {
      %cst_10 = arith.constant 0.000000e+00 : f32
      %12 = vector.broadcast %cst_10 : f32 to vector<16x96xf32>
      %c0_11 = arith.constant 0 : index
      %c0_12 = arith.constant 0 : index
      %13 = vector.load %arg7[%c0_11, %c0_12] : memref<16x96xf32, #tpu.memory_space<vmem>>, vector<16x96xf32>
      tpu.vector_store %arg7[%c0_11, %c0_12], %12 {strides = array<i32>} : memref<16x96xf32, #tpu.memory_space<vmem>>, vector<16x96xf32>,
    } else {
    }
    %c0 = arith.constant 0 : index
    %c0_1 = arith.constant 0 : index
    %3 = vector.load %arg7[%c0, %c0_1] : memref<16x96xf32, #tpu.memory_space<vmem>>, vector<16x96xf32>
    %c0_2 = arith.constant 0 : index
    %c0_3 = arith.constant 0 : index
    %4 = vector.load %arg3[%c0_2, %c0_3] : memref<16x32xbf16, #tpu.memory_space<vmem>>, vector<16x32xbf16>
    %c0_4 = arith.constant 0 : index
    %c0_5 = arith.constant 0 : index
    %5 = vector.load %arg4[%c0_4, %c0_5] : memref<32x96xbf16, #tpu.memory_space<vmem>>, vector<32x96xbf16>
    %cst = arith.constant dense<0.000000e+00> : vector<16x96xf32>
    %6 = tpu.matmul %4, %5, %cst {dimension_numbers = #tpu.dot_dimension_numbers<[1], [0], [0], [1], [0, 0, 1, 1], [], []>} : vector<16x32xbf16>, vector<32x96xbf16>, vector<16x96xf32> -> vector<16x96xf32>
    %7 = arith.addf %3, %6 : vector<16x96xf32>
    %c0_6 = arith.constant 0 : index
    %c0_7 = arith.constant 0 : index
    %8 = vector.load %arg7[%c0_6, %c0_7] : memref<16x96xf32, #tpu.memory_space<vmem>>, vector<16x96xf32>
    tpu.vector_store %arg7[%c0_6, %c0_7], %7 {strides = array<i32>} : memref<16x96xf32, #tpu.memory_space<vmem>>, vector<16x96xf32>,
    %c0_i32_8 = arith.constant 0 : i32
    %9 = arith.cmpi eq, %arg2, %c0_i32_8 : i32
    %10 = arith.extui %9 : i1 to i32
    %c0_i32_9 = arith.constant 0 : i32
    %11 = arith.cmpi ne, %10, %c0_i32_9 : i32
    scf.if %11 {
      %c0_10 = arith.constant 0 : index
      %c0_11 = arith.constant 0 : index
      %12 = vector.load %arg7[%c0_10, %c0_11] : memref<16x96xf32, #tpu.memory_space<vmem>>, vector<16x96xf32>
      %c0_12 = arith.constant 0 : index
      %c0_13 = arith.constant 0 : index
      %13 = vector.load %arg5[%c0_12, %c0_13] : memref<1x96xf32, #tpu.memory_space<vmem>>, vector<1x96xf32>
      %14 = vector.broadcast %13 : vector<1x96xf32> to vector<16x96xf32>
      %15 = arith.addf %12, %14 : vector<16x96xf32>
      %16 = arith.truncf %15 : vector<16x96xf32> to vector<16x96xbf16>
      %c0_14 = arith.constant 0 : index
      %c0_15 = arith.constant 0 : index
      %17 = vector.load %arg6[%c0_14, %c0_15] : memref<16x96xbf16, #tpu.memory_space<vmem>>, vector<16x96xbf16>
      tpu.vector_store %arg6[%c0_14, %c0_15], %16 {strides = array<i32>} : memref<16x96xbf16, #tpu.memory_space<vmem>>, vector<16x96xbf16>,
    } else {
    }
    return
  }
  func.func @transform_0(%arg0: i32, %arg1: i32, %arg2: i32) -> (i32, i32) {
    %c0_i32 = arith.constant 0 : i32
    return %arg0, %arg2 : i32, i32
  }
  func.func @transform_1(%arg0: i32, %arg1: i32, %arg2: i32) -> (i32, i32) {
    %c0_i32 = arith.constant 0 : i32
    return %arg2, %arg1 : i32, i32
  }
  func.func @transform_2(%arg0: i32, %arg1: i32, %arg2: i32) -> (i32, i32) {
    %c0_i32 = arith.constant 0 : i32
    %c0_i32_0 = arith.constant 0 : i32
    return %c0_i32, %arg1 : i32, i32
  }
  func.func @transform_3(%arg0: i32, %arg1: i32, %arg2: i32) -> (i32, i32) {
    %c0_i32 = arith.constant 0 : i32
    return %arg0, %arg1 : i32, i32
  }
}

</mosaic_0001>

<llo_original>
// kernel: tpu_custom_call.1
$region0: #{tpu_custom_call.1}
  #allocation0 [shape = 'u32[]', space=smem, size = 0x4, offset = 0x4, fixed_abs, tag = 'smem constant byte address 0x4 - core index']
  #allocation1 [shape = 'u32[144,128]{1,0:T(1,128)}', space=vmem, size = 0x12000, scoped, tag = 'internal scratch']
  #allocation2 [shape = 'f32[16,96]{1,0:T(8,128)}', space=vmem, size = 0x2000, scoped, tag = 'scratch operand']
  %s0 = inlined_call_operand.hbm [shape: bf16[16,32], index: 0, kind: input, shape index: {}]
  %s1 = inlined_call_operand.hbm [shape: bf16[32,96], index: 1, kind: input, shape index: {}]
  %s2 = inlined_call_operand.vmem [shape: f32[1,96], index: 2, kind: input, shape index: {}]
  %s3 = inlined_call_operand.hbm [shape: bf16[16,96], index: 3, kind: output, shape index: {}]
  %s4 = sld [smem:[#allocation0]]
  $region38: #{tpu_custom_call.1} parent=0
    _
  %s6 = ssub.s32 1, %s4
  %s7 = scalar_select 0, %s6, %s4
  $region1: #{tpu_custom_call.1} parent=0
    #allocation3 [shape = 'u8[4096]{0}', space=vmem, size = 0x1000, scoped, tag = 'input window, operand 0, single buffered']
    #allocation4 [shape = 's32[1]{0}', space=sflag, size = 0x4, scoped, tag = 'scoped memory for tpu_custom_call.1']
    #allocation5 [shape = 's32[1]{0}', space=sflag, size = 0x4, scoped, tag = 'scoped memory for tpu_custom_call.1']
    #allocation6 [shape = 'u8[8192]{0}', space=vmem, size = 0x2000, scoped, tag = 'input window, operand 1, single buffered']
    #allocation7 [shape = 's32[1]{0}', space=sflag, size = 0x4, scoped, tag = 'scoped memory for tpu_custom_call.1']
    #allocation8 [shape = 'u8[4096]{0}', space=vmem, size = 0x1000, scoped, tag = 'output window, operand 0, single buffered']
    %8 = vsyncpa [#allocation4], 0
    %9 = vsyncpa [#allocation7], 0
    %10 = vsyncpa [#allocation5], 0
    // Predicated region
    $region2: #{tpu_custom_call.1} parent=1 // pred_check
      _
    $region3: #{tpu_custom_call.1} parent=1 // pred_check_branch
      %12 = sbr.rel (0) target = $region5
    $region4: #{tpu_custom_call.1} parent=1 // pred_region
      %s14 = ssub.s32 128, 128
      %15 = vsyncadd [#allocation4], %s14
      %s16 = sshll.u32 [#allocation3], 4
      %s17 = int_to_ptr.vmem [resolvable:$true] %s16
      %22 = dma.hbm_to_vmem [thread:$0]  %s0, 128, %s17, [#allocation4], 64, 64, 4
    $region5: #{tpu_custom_call.1} parent=1 // pred_fallthru
      _
    // Predicated region
    $region6: #{tpu_custom_call.1} parent=1 // pred_check
      _
    $region7: #{tpu_custom_call.1} parent=1 // pred_check_branch
      %24 = sbr.rel (0) target = $region9
    $region8: #{tpu_custom_call.1} parent=1 // pred_region
      %s26 = ssub.s32 256, 256
      %27 = vsyncadd [#allocation7], %s26
      %s28 = sshll.u32 [#allocation6], 4
      %s29 = int_to_ptr.vmem [resolvable:$true] %s28
      %34 = dma.hbm_to_vmem [thread:$0]  %s1, 256, %s29, [#allocation7], 64, 64, 4
    $region9: #{tpu_custom_call.1} parent=1 // pred_fallthru
      _
    // Predicated region
    $region10: #{tpu_custom_call.1} parent=1 // pred_check
      _
    $region11: #{tpu_custom_call.1} parent=1 // pred_check_branch
      %36 = sbr.rel (0) target = $region13
    $region12: #{tpu_custom_call.1} parent=1 // pred_region
      _
    $region13: #{tpu_custom_call.1} parent=1 // pred_fallthru
      _
    // Predicated region
    $region14: #{tpu_custom_call.1} parent=1 // pred_check
      _
    $region15: #{tpu_custom_call.1} parent=1 // pred_check_branch
      %38 = sbr.rel (0) target = $region17
    $region16: #{tpu_custom_call.1} parent=1 // pred_region
      %39 = dma.done [#allocation4], 128
    $region17: #{tpu_custom_call.1} parent=1 // pred_fallthru
      _
    // Predicated region
    $region18: #{tpu_custom_call.1} parent=1 // pred_check
      _
    $region19: #{tpu_custom_call.1} parent=1 // pred_check_branch
      %41 = sbr.rel (0) target = $region21
    $region20: #{tpu_custom_call.1} parent=1 // pred_region
      %42 = dma.done [#allocation7], 256
    $region21: #{tpu_custom_call.1} parent=1 // pred_fallthru
      _
    %p44 = scmp.eq.s32.totalorder 0, 0
    // Predicated region
    $region22: #{tpu_custom_call.1} parent=1 // pred_check
      %p45 = pneg %p44
    $region23: #{tpu_custom_call.1} parent=1 // pred_check_branch
      %47 = sbr.rel (%p45) target = $region25
    $region24: #{tpu_custom_call.1} parent=1 // pred_region
      %vm48 = vcmask 785408
      %49 = vst.msk [vmem:[#allocation2] sm:$0xff] %vm48, 0.0
      %50 = vst.msk [vmem:[#allocation2 + $0x8] sm:$0xff] %vm48, 0.0
    $region25: #{tpu_custom_call.1} parent=1 // pred_fallthru
      _
    %v51 = vld [vmem:[#allocation2] sm:$0xff]
    %v52 = vld [vmem:[#allocation2 + $0x8] sm:$0xff]
    %v53 = vld [vmem:[#allocation3] sm:$0xf]
    %v54 = vld [vmem:[#allocation3 + $0x4] sm:$0xf]
    %v55 = vld [vmem:[#allocation6] sm:$0xf]
    %v56 = vld [vmem:[#allocation6 + $0x4] sm:$0xf]
    %v57 = vld [vmem:[#allocation6 + $0x8] sm:$0xf]
    %v58 = vld [vmem:[#allocation6 + $0xc] sm:$0xf]
    %v61 = vunpack.c.l.b16 %v53
    %v62 = vunpack.c.l.b16 %v54
    %v63 = vpack.c.b16 %v62, %v61
    %v68 = vunpack.c.l.b16 %v55
    %v69 = vunpack.c.l.b16 %v56
    %v70 = vunpack.c.l.b16 %v57
    %v71 = vunpack.c.l.b16 %v58
    %v72 = vpack.c.b16 %v69, %v68
    %v73 = vpack.c.b16 %v71, %v70
    %vm76 = vcmask 261120
    %v78 = vsel %vm76, %v63, 0
    %80 = vmatprep.subr.bf16.mxu0 0
    %81 = vmatpush1.bf16.msra.mxu0 %v72
    %82 = vmatprep.subr.bf16.mxu0 0
    %83 = vmatpush1.bf16.msra.mxu0 %v73
    %84 = vmatprep.subr.bf16.mxu0 0
    %85 = vmatpush1.bf16.msra.mxu0 0
    %86 = vmatprep.subr.bf16.mxu0 0
    %87 = vmatpush1.bf16.msra.mxu0 0
    %88 = vmatprep.subr.bf16.mxu0 0
    %89 = vmatpush1.bf16.msra.mxu0 0
    %90 = vmatprep.subr.bf16.mxu0 0
    %91 = vmatpush1.bf16.msra.mxu0 0
    %92 = vmatprep.subr.bf16.mxu0 0
    %93 = vmatpush1.bf16.msra.mxu0 0
    %94 = vmatprep.subr.bf16.mxu0 0
    %95 = vmatpush1.bf16.msra.mxu0 0
    %96 = vmatprep.subr.bf16.mxu0 0
    %97 = vmatpush1.bf16.msra.mxu0 0
    %98 = vmatprep.subr.bf16.mxu0 0
    %99 = vmatpush1.bf16.msra.mxu0 0
    %100 = vmatprep.subr.bf16.mxu0 0
    %101 = vmatpush1.bf16.msra.mxu0 0
    %102 = vmatprep.subr.bf16.mxu0 0
    %103 = vmatpush1.bf16.msra.mxu0 0
    %104 = vmatprep.subr.bf16.mxu0 0
    %105 = vmatpush1.bf16.msra.mxu0 0
    %106 = vmatprep.subr.bf16.mxu0 0
    %107 = vmatpush1.bf16.msra.mxu0 0
    %108 = vmatprep.subr.bf16.mxu0 0
    %109 = vmatpush1.bf16.msra.mxu0 0
    %110 = vmatprep.subr.bf16.mxu0 0
    %111 = vmatpush1.bf16.msra.mxu0 0
    %112 = vmatprep.mubr.bf16.mxu0 0
    %113 = vmatmul.mubr.bf16.gmra.mrb[0].mxu0 %v78
    %v114 = vpop.f32.mrb[0].mxu0
    %v115 = vadd.f32 0.0, %v114
    %v116 = vpop.f32.mrb[0].mxu0
    %v117 = vpop.f32.mrb[0].mxu0
    %v118 = vadd.f32 0.0, %v117
    %v119 = vpop.f32.mrb[0].mxu0
    %120 = vdwg.mxu0
    %v121 = vadd.f32 %v51, %v115
    %v122 = vadd.f32 %v52, %v118
    %vm123 = vcmask 785408
    %124 = vst.msk [vmem:[#allocation2] sm:$0xff] %vm123, %v121
    %125 = vst.msk [vmem:[#allocation2 + $0x8] sm:$0xff] %vm123, %v122
    // Predicated region
    $region26: #{tpu_custom_call.1} parent=1 // pred_check
      %p126 = pneg %p44
    $region27: #{tpu_custom_call.1} parent=1 // pred_check_branch
      %128 = sbr.rel (%p126) target = $region29
    $region28: #{tpu_custom_call.1} parent=1 // pred_region
      %v129 = vld [vmem:[#allocation2] sm:$0xff]
      %v130 = vld [vmem:[#allocation2 + $0x8] sm:$0xff]
      %v131 = vld [vmem:[%s2] sm:$0x1]
      %v133 = vlaneseq
      %v134 = vshrl.u32 %v133, 7
      %v135 = vsub.s32 0, %v134
      %v136 = vrot.slane %v131, %v135
      %v138 = vadd.f32 %v129, %v136
      %v139 = vadd.f32 %v130, %v136
      %v140 = vpack.c.bf16 %v139, %v138
      %v142 = vunpack.c.l.b16 %v140
      %v143 = vunpack.c.h.b16 %v140
      %v144 = vpack.c.b16 %v142, %v142
      %v145 = vpack.c.b16 %v143, %v143
      %vm148 = vcmask 781312
      %149 = vst.msk [vmem:[#allocation8] sm:$0xf] %vm148, %v144
      %150 = vst.msk [vmem:[#allocation8 + $0x4] sm:$0xf] %vm148, %v145
    $region29: #{tpu_custom_call.1} parent=1 // pred_fallthru
      _
    // Predicated region
    $region30: #{tpu_custom_call.1} parent=1 // pred_check
      _
    $region31: #{tpu_custom_call.1} parent=1 // pred_check_branch
      %152 = sbr.rel (0) target = $region33
    $region32: #{tpu_custom_call.1} parent=1 // pred_region
      %s154 = ssub.s32 128, 128
      %155 = vsyncadd [#allocation5], %s154
      %s156 = sshll.u32 [#allocation8], 4
      %s157 = int_to_ptr.vmem [resolvable:$true] %s156
      %162 = dma.vmem_to_hbm [thread:$0]  %s157, 128, %s3, [#allocation5], 64, 64, 4
    $region33: #{tpu_custom_call.1} parent=1 // pred_fallthru
      _
    // Predicated region
    $region34: #{tpu_custom_call.1} parent=1 // pred_check
      _
    $region35: #{tpu_custom_call.1} parent=1 // pred_check_branch
      %164 = sbr.rel (0) target = $region37
    $region36: #{tpu_custom_call.1} parent=1 // pred_region
      %165 = dma.done [#allocation5], 128
    $region37: #{tpu_custom_call.1} parent=1 // pred_fallthru
      _
    %166 = vsyncpa [#allocation4], 1
    %167 = vsyncpa [#allocation7], 1
    %168 = vsyncpa [#allocation5], 1

</llo_original>
